<compile_context>
chip_gen: v7x
topology: tpu7x:2x2x1
jax: 0.10.0
libtpu: 0.0.40
codegen_flags: <defaults>
</compile_context>

<pallas_src>
import jax
import jax.numpy as jnp
from jax.experimental import pallas as pl
from jax.experimental.pallas import tpu as pltpu


_MAX_BATCH_BLOCK = 4096  # cap keeps double-buffered per-step VMEM small on all generations


def _round_up(x, m):
    return ((x + m - 1) // m) * m


def _pick_batch_block(batch):
    """Lane-dense batch tile: as large as possible, but >=2 grid blocks when B allows
    (v7x has 2 TensorCores splitting the 'parallel' batch axis)."""
    bb = _round_up(pl.cdiv(batch, 2), 256)
    return int(min(_MAX_BATCH_BLOCK, max(256, bb)))


def _pd_unfolding_kernel(bounds_ref,                                   # SMEM (2,)  [u_lb, u_ub]
                         a_u_ref, a_s_ref, b_d_ref,                    # dual params (VMEM-resident)
                         p_c_ref, p_s_ref, p_m_ref,                    # primal params (VMEM-resident)
                         cmd_prev_ref, cmd_cur_ref, s0t_ref, miu_ref,  # batch-tiled activations
                         cmd_next_ref, miu_new_ref):
    f32 = jnp.float32
    cmd_cur = cmd_cur_ref[...]                    # (size_in, bb)
    u = 2.0 * cmd_cur - cmd_prev_ref[...]         # (size_in, bb)
    s0t = s0t_ref[...]                            # (size_state, bb)

    # ---- dual update: dot-and-accumulate + bias + ReLU (no sublane concat) ----
    dvar = (miu_ref[...]
            + jnp.dot(a_u_ref[...], u, preferred_element_type=f32)
            + jnp.dot(a_s_ref[...], s0t, preferred_element_type=f32)
            + b_d_ref[...])                        # (M, bb); bias broadcasts over lanes
    miu_new = jnp.maximum(dvar, 0.0)               # ReLU
    miu_new_ref[...] = miu_new

    # ---- primal update: dot-and-accumulate + Hardtanh ----
    cmd_next = (jnp.dot(p_c_ref[...], cmd_cur, preferred_element_type=f32)
                + jnp.dot(p_s_ref[...], s0t, preferred_element_type=f32)
                + jnp.dot(p_m_ref[...], miu_new, preferred_element_type=f32))
    cmd_next_ref[...] = jnp.clip(cmd_next, bounds_ref[0], bounds_ref[1])


def pd_unfolding_forward(params, cmd_prev, cmd_cur, miu_cur, state0, u_lb, u_ub):
    """Returns (cmdCurrent, hardT(cmdNext), miu_new, state0), mirroring the torch module."""
    H, Q1, Q2, Q3, Q4 = params["H"], params["Q1"], params["Q2"], params["Q3"], params["Q4"]
    Cx, dx, lbd, gamma = params["Cx"], params["dx"], params["lbd"], params["gamma"]

    f32 = jnp.float32
    size_in, B = cmd_cur.shape
    size_state = state0.shape[1]
    M = Cx.shape[0]

    # ---- constant folding of the parameter-matrix chains (tiny, once per call) ----
    lbd0 = lbd[0].astype(f32)
    gamma0 = gamma[0].astype(f32)
    pond = lbd0 / gamma0
    CxQ1 = jnp.dot(Cx, Q1)                                      # (M, size_in)
    A_u = (pond * CxQ1 - lbd0 * jnp.dot(CxQ1, H)).astype(f32)   # (M, size_in)
    A_s = (-pond * jnp.dot(Cx, Q2)).astype(f32)                 # (M, size_state)
    b_d = (-pond * dx).astype(f32)                              # (M, 1)

    P_c = (jnp.eye(size_in, dtype=f32) - gamma0 * H).astype(f32)   # (size_in, size_in)
    P_s = (-gamma0 * jnp.dot(Q3, Q2)).astype(f32)                  # (size_in, size_state)
    P_m = (-gamma0 * jnp.dot(Q4, Cx.T)).astype(f32)                # (size_in, M)

    bounds = jnp.asarray([u_lb, u_ub], dtype=f32)               # -> SMEM (runtime-variable bounds)

    # ---- batch tiling: no wrapper pad, ragged last block handled by Pallas ----
    bb = _pick_batch_block(B)
    n_blocks = pl.cdiv(B, bb)

    cmd_prev_f = cmd_prev.astype(f32)
    cmd_cur_f = cmd_cur.astype(f32)
    miu_f = miu_cur.astype(f32)
    s0t_f = state0.T.astype(f32)                                 # layout glue: (size_state, B)

    def param_spec(shape):
        # Constant block index -> parameter stays resident in VMEM (no re-DMA per step).
        return pl.BlockSpec(shape, lambda b: (0,) * len(shape))

    def batch_spec(rows):
        return pl.BlockSpec((rows, bb), lambda b: (0, b))

    smem_spec = pl.BlockSpec(memory_space=pltpu.MemorySpace.SMEM)

    # Advisory cost: this kernel is HBM-bandwidth / grid-overhead bound.
    act_bytes = 4 * B * (2 * size_in + size_state + M + size_in + M)
    param_bytes = 4 * (A_u.size + A_s.size + b_d.size + P_c.size + P_s.size + P_m.size)
    gemm_flops = 2 * B * (M * size_in + M * size_state
                          + size_in * size_in + size_in * size_state + size_in * M)
    cost = pl.CostEstimate(flops=int(gemm_flops), transcendentals=0,
                           bytes_accessed=int(act_bytes + param_bytes))

    cmd_next, miu_new = pl.pallas_call(
        _pd_unfolding_kernel,
        grid=(n_blocks,),
        out_shape=(jax.ShapeDtypeStruct((size_in, B), f32),
                   jax.ShapeDtypeStruct((M, B), f32)),
        in_specs=[smem_spec,                       # bounds
                  param_spec(A_u.shape),           # A_u
                  param_spec(A_s.shape),           # A_s
                  param_spec(b_d.shape),           # b_d
                  param_spec(P_c.shape),           # P_c
                  param_spec(P_s.shape),           # P_s
                  param_spec(P_m.shape),           # P_m
                  batch_spec(size_in),             # cmd_prev
                  batch_spec(size_in),             # cmd_cur
                  batch_spec(size_state),          # state0^T
                  batch_spec(M)],                  # miu
        out_specs=(batch_spec(size_in),            # cmd_next
                   batch_spec(M)),                 # miu_new
        compiler_params=pltpu.CompilerParams(
            dimension_semantics=("parallel",)),    # v7x: split batch blocks over the 2 TensorCores
        cost_estimate=cost,
    )(bounds, A_u, A_s, b_d, P_c, P_s, P_m, cmd_prev_f, cmd_cur_f, s0t_f, miu_f)

    return cmd_cur, cmd_next, miu_new, state0


def _reference_forward(params, cmd_prev, cmd_cur, miu_cur, state0, u_lb, u_ub):
    H, Q1, Q2, Q3, Q4 = params["H"], params["Q1"], params["Q2"], params["Q3"], params["Q4"]
    Cx, dx, lbd, gamma = params["Cx"], params["dx"], params["lbd"], params["gamma"]
    u = 2.0 * cmd_cur - cmd_prev
    dvar1 = Cx @ (Q1 @ u)
    dvar3 = Cx @ (Q1 @ (H @ u))
    q2s = Q2 @ state0.T
    dvar2 = Cx @ q2s
    pond = lbd[0] / gamma[0]
    dvar = miu_cur + pond * (dvar1 - dx - dvar2) - lbd[0] * dvar3
    miu_new = jnp.maximum(dvar, 0.0)
    pvar1 = Q4 @ (Cx.T @ miu_new)
    cmd_next = cmd_cur - gamma[0] * (H @ cmd_cur + Q3 @ q2s + pvar1)
    return jnp.clip(cmd_next, u_lb, u_ub), miu_new


if __name__ == "__main__":
    # Small, forward-consistent shapes.  B=500 deliberately exercises both a
    # multi-block grid (bb=256 -> 2 blocks) and the ragged final batch block.
    size_in, size_out, size_state, size_horz = 8, 8, 4, 4
    B = 500
    HS = size_horz * size_state        # 16
    M = 2 * HS                         # 32  (rows of Cx)
    u_lb, u_ub = -1.0, 1.0

    key = jax.random.PRNGKey(0)
    keys = jax.random.split(key, 8)

    # Deterministic parameter init (torch inits H/Q1/Q2/Q3 to zeros, Q4 to ones,
    # lbd to ones, gamma uninitialized; use small random values for a non-trivial test).
    params = {
        "H":  0.1 * jax.random.normal(keys[0], (size_in, size_in), jnp.float32),
        "Q1": 0.1 * jax.random.normal(keys[1], (HS, size_in), jnp.float32),
        "Q2": 0.1 * jax.random.normal(keys[2], (HS, size_state), jnp.float32),
        "Q3": 0.1 * jax.random.normal(keys[3], (size_in, HS), jnp.float32),
        "Q4": jnp.ones((size_in, HS), jnp.float32),
        "lbd": jnp.ones((1,), jnp.float32),
        "gamma": jnp.full((1,), 0.5, jnp.float32),
    }

    # Constant buffers (torch builds these in float64; kept f32 here -- exact for 0/+-1 Cx).
    z_ub = jnp.full((size_state,), 2.0, jnp.float32)
    z_lb = jnp.full((size_state,), -2.0, jnp.float32)
    eyeS = jnp.eye(size_state, dtype=jnp.float32)
    blk = jnp.concatenate([eyeS, -eyeS], axis=0)                          # (2S, S)
    params["Cx"] = jnp.kron(jnp.eye(size_horz, dtype=jnp.float32), blk)   # (M, HS)
    z_ub_concat = jnp.concatenate([z_ub, -z_lb])                          # (2S,)
    params["dx"] = jnp.tile(z_ub_concat.reshape(-1, 1), (size_horz, 1))   # (M, 1)

    # Inputs in (feature, batch) layout.
    cmd_prev = jax.random.normal(keys[4], (size_in, B), jnp.float32)
    cmd_cur = jax.random.normal(keys[5], (size_in, B), jnp.float32)
    miu_cur = jax.random.normal(keys[6], (M, B), jnp.float32)
    state0 = jax.random.normal(keys[7], (B, size_state), jnp.float32)

    forward = jax.jit(pd_unfolding_forward)
    out = forward(params, cmd_prev, cmd_cur, miu_cur, state0, u_lb, u_ub)
    out = jax.block_until_ready(out)
    cmd_cur_out, cmd_next_out, miu_new_out, state0_out = out

    # Correctness check against a pure-JAX reference.
    ref_cmd_next, ref_miu_new = _reference_forward(
        params, cmd_prev, cmd_cur, miu_cur, state0, u_lb, u_ub)
    assert cmd_cur_out.shape == (size_in, B)
    assert cmd_next_out.shape == (size_in, B)
    assert miu_new_out.shape == (M, B)
    assert state0_out.shape == (B, size_state)
    assert jnp.allclose(cmd_next_out, ref_cmd_next, atol=1e-3, rtol=1e-2)
    assert jnp.allclose(miu_new_out, ref_miu_new, atol=1e-3, rtol=1e-2)
    assert jnp.array_equal(cmd_cur_out, cmd_cur)
    assert jnp.array_equal(state0_out, state0)

    print("KERNEL_OK")
</pallas_src>

<mosaic_0001>
module attributes {stable_mosaic.version = 11 : i64} {
  func.func @_pd_unfolding_kernel(%arg0: i32, %arg1: memref<2xf32, #tpu.memory_space<smem>>, %arg2: memref<32x8xf32, #tpu.memory_space<vmem>>, %arg3: memref<32x4xf32, #tpu.memory_space<vmem>>, %arg4: memref<32x1xf32, #tpu.memory_space<vmem>>, %arg5: memref<8x8xf32, #tpu.memory_space<vmem>>, %arg6: memref<8x4xf32, #tpu.memory_space<vmem>>, %arg7: memref<8x32xf32, #tpu.memory_space<vmem>>, %arg8: memref<8x256xf32, #tpu.memory_space<vmem>>, %arg9: memref<8x256xf32, #tpu.memory_space<vmem>>, %arg10: memref<4x256xf32, #tpu.memory_space<vmem>>, %arg11: memref<32x256xf32, #tpu.memory_space<vmem>>, %arg12: memref<8x256xf32, #tpu.memory_space<vmem>>, %arg13: memref<32x256xf32, #tpu.memory_space<vmem>>) attributes {dimension_semantics = [#tpu.dimension_semantics<parallel>], iteration_bounds = array<i64: 2>, scalar_prefetch = 0 : i64, scratch_operands = 0 : i64, tpu.core_type = #tpu.core_type<tc>, window_params = [{transform_indices = @transform_0, window_bounds = array<i64: 2>}, {pipeline_mode = #tpu.pipeline_mode<synchronous>, transform_indices = @transform_1, window_bounds = array<i64: 32, 8>}, {pipeline_mode = #tpu.pipeline_mode<synchronous>, transform_indices = @transform_2, window_bounds = array<i64: 32, 4>}, {pipeline_mode = #tpu.pipeline_mode<synchronous>, transform_indices = @transform_3, window_bounds = array<i64: 32, 1>}, {pipeline_mode = #tpu.pipeline_mode<synchronous>, transform_indices = @transform_4, window_bounds = array<i64: 8, 8>}, {pipeline_mode = #tpu.pipeline_mode<synchronous>, transform_indices = @transform_5, window_bounds = array<i64: 8, 4>}, {pipeline_mode = #tpu.pipeline_mode<synchronous>, transform_indices = @transform_6, window_bounds = array<i64: 8, 32>}, {transform_indices = @transform_7, window_bounds = array<i64: 8, 256>}, {transform_indices = @transform_8, window_bounds = array<i64: 8, 256>}, {transform_indices = @transform_9, window_bounds = array<i64: 4, 256>}, {transform_indices = @transform_10, window_bounds = array<i64: 32, 256>}, {transform_indices = @transform_11, window_bounds = array<i64: 8, 256>}, {transform_indices = @transform_12, window_bounds = array<i64: 32, 256>}]} {
    %c0 = arith.constant 0 : index
    %c0_0 = arith.constant 0 : index
    %0 = vector.load %arg9[%c0, %c0_0] : memref<8x256xf32, #tpu.memory_space<vmem>>, vector<8x256xf32>
    %cst = arith.constant 2.000000e+00 : f32
    %1 = vector.broadcast %cst : f32 to vector<8x256xf32>
    %2 = arith.mulf %1, %0 : vector<8x256xf32>
    %c0_1 = arith.constant 0 : index
    %c0_2 = arith.constant 0 : index
    %3 = vector.load %arg8[%c0_1, %c0_2] : memref<8x256xf32, #tpu.memory_space<vmem>>, vector<8x256xf32>
    %4 = arith.subf %2, %3 : vector<8x256xf32>
    %c0_3 = arith.constant 0 : index
    %c0_4 = arith.constant 0 : index
    %5 = vector.load %arg10[%c0_3, %c0_4] : memref<4x256xf32, #tpu.memory_space<vmem>>, vector<4x256xf32>
    %c0_5 = arith.constant 0 : index
    %c0_6 = arith.constant 0 : index
    %6 = vector.load %arg11[%c0_5, %c0_6] : memref<32x256xf32, #tpu.memory_space<vmem>>, vector<32x256xf32>
    %c0_7 = arith.constant 0 : index
    %c0_8 = arith.constant 0 : index
    %7 = vector.load %arg2[%c0_7, %c0_8] : memref<32x8xf32, #tpu.memory_space<vmem>>, vector<32x8xf32>
    %cst_9 = arith.constant dense<0.000000e+00> : vector<32x256xf32>
    %8 = tpu.matmul %7, %4, %cst_9 {dimension_numbers = #tpu.dot_dimension_numbers<[1], [0], [0], [1], [0, 0, 1, 1], [], []>} : vector<32x8xf32>, vector<8x256xf32>, vector<32x256xf32> -> vector<32x256xf32>
    %9 = arith.addf %6, %8 : vector<32x256xf32>
    %c0_10 = arith.constant 0 : index
    %c0_11 = arith.constant 0 : index
    %10 = vector.load %arg3[%c0_10, %c0_11] : memref<32x4xf32, #tpu.memory_space<vmem>>, vector<32x4xf32>
    %cst_12 = arith.constant dense<0.000000e+00> : vector<32x256xf32>
    %11 = tpu.matmul %10, %5, %cst_12 {dimension_numbers = #tpu.dot_dimension_numbers<[1], [0], [0], [1], [0, 0, 1, 1], [], []>} : vector<32x4xf32>, vector<4x256xf32>, vector<32x256xf32> -> vector<32x256xf32>
    %12 = arith.addf %9, %11 : vector<32x256xf32>
    %c0_13 = arith.constant 0 : index
    %c0_14 = arith.constant 0 : index
    %13 = vector.load %arg4[%c0_13, %c0_14] : memref<32x1xf32, #tpu.memory_space<vmem>>, vector<32x1xf32>
    %14 = vector.broadcast %13 : vector<32x1xf32> to vector<32x256xf32>
    %15 = arith.addf %12, %14 : vector<32x256xf32>
    %cst_15 = arith.constant 0.000000e+00 : f32
    %16 = vector.broadcast %cst_15 : f32 to vector<32x256xf32>
    %17 = arith.maximumf %15, %16 : vector<32x256xf32>
    %c0_16 = arith.constant 0 : index
    %c0_17 = arith.constant 0 : index
    %18 = vector.load %arg13[%c0_16, %c0_17] : memref<32x256xf32, #tpu.memory_space<vmem>>, vector<32x256xf32>
    tpu.vector_store %arg13[%c0_16, %c0_17], %17 {strides = array<i32>} : memref<32x256xf32, #tpu.memory_space<vmem>>, vector<32x256xf32>,
    %c0_18 = arith.constant 0 : index
    %c0_19 = arith.constant 0 : index
    %19 = vector.load %arg5[%c0_18, %c0_19] : memref<8x8xf32, #tpu.memory_space<vmem>>, vector<8x8xf32>
    %cst_20 = arith.constant dense<0.000000e+00> : vector<8x256xf32>
    %20 = tpu.matmul %19, %0, %cst_20 {dimension_numbers = #tpu.dot_dimension_numbers<[1], [0], [0], [1], [0, 0, 1, 1], [], []>} : vector<8x8xf32>, vector<8x256xf32>, vector<8x256xf32> -> vector<8x256xf32>
    %c0_21 = arith.constant 0 : index
    %c0_22 = arith.constant 0 : index
    %21 = vector.load %arg6[%c0_21, %c0_22] : memref<8x4xf32, #tpu.memory_space<vmem>>, vector<8x4xf32>
    %cst_23 = arith.constant dense<0.000000e+00> : vector<8x256xf32>
    %22 = tpu.matmul %21, %5, %cst_23 {dimension_numbers = #tpu.dot_dimension_numbers<[1], [0], [0], [1], [0, 0, 1, 1], [], []>} : vector<8x4xf32>, vector<4x256xf32>, vector<8x256xf32> -> vector<8x256xf32>
    %23 = arith.addf %20, %22 : vector<8x256xf32>
    %c0_24 = arith.constant 0 : index
    %c0_25 = arith.constant 0 : index
    %24 = vector.load %arg7[%c0_24, %c0_25] : memref<8x32xf32, #tpu.memory_space<vmem>>, vector<8x32xf32>
    %cst_26 = arith.constant dense<0.000000e+00> : vector<8x256xf32>
    %25 = tpu.matmul %24, %17, %cst_26 {dimension_numbers = #tpu.dot_dimension_numbers<[1], [0], [0], [1], [0, 0, 1, 1], [], []>} : vector<8x32xf32>, vector<32x256xf32>, vector<8x256xf32> -> vector<8x256xf32>
    %26 = arith.addf %23, %25 : vector<8x256xf32>
    %c0_27 = arith.constant 0 : index
    %27 = memref.load %arg1[%c0_27] : memref<2xf32, #tpu.memory_space<smem>>
    %c1 = arith.constant 1 : index
    %28 = memref.load %arg1[%c1] : memref<2xf32, #tpu.memory_space<smem>>
    %29 = vector.broadcast %27 : f32 to vector<8x256xf32>
    %30 = arith.maximumf %29, %26 : vector<8x256xf32>
    %31 = vector.broadcast %28 : f32 to vector<8x256xf32>
    %32 = arith.minimumf %31, %30 : vector<8x256xf32>
    %c0_28 = arith.constant 0 : index
    %c0_29 = arith.constant 0 : index
    %33 = vector.load %arg12[%c0_28, %c0_29] : memref<8x256xf32, #tpu.memory_space<vmem>>, vector<8x256xf32>
    tpu.vector_store %arg12[%c0_28, %c0_29], %32 {strides = array<i32>} : memref<8x256xf32, #tpu.memory_space<vmem>>, vector<8x256xf32>,
    return
  }
  func.func @transform_0(%arg0: i32) -> i32 {
    %c0_i32 = arith.constant 0 : i32
    %c0_i32_0 = arith.constant 0 : i32
    return %c0_i32 : i32
  }
  func.func @transform_1(%arg0: i32) -> (i32, i32) {
    %c0_i32 = arith.constant 0 : i32
    %c0_i32_0 = arith.constant 0 : i32
    %c0_i32_1 = arith.constant 0 : i32
    return %c0_i32, %c0_i32_0 : i32, i32
  }
  func.func @transform_2(%arg0: i32) -> (i32, i32) {
    %c0_i32 = arith.constant 0 : i32
    %c0_i32_0 = arith.constant 0 : i32
    %c0_i32_1 = arith.constant 0 : i32
    return %c0_i32, %c0_i32_0 : i32, i32
  }
  func.func @transform_3(%arg0: i32) -> (i32, i32) {
    %c0_i32 = arith.constant 0 : i32
    %c0_i32_0 = arith.constant 0 : i32
    %c0_i32_1 = arith.constant 0 : i32
    return %c0_i32, %c0_i32_0 : i32, i32
  }
  func.func @transform_4(%arg0: i32) -> (i32, i32) {
    %c0_i32 = arith.constant 0 : i32
    %c0_i32_0 = arith.constant 0 : i32
    %c0_i32_1 = arith.constant 0 : i32
    return %c0_i32, %c0_i32_0 : i32, i32
  }
  func.func @transform_5(%arg0: i32) -> (i32, i32) {
    %c0_i32 = arith.constant 0 : i32
    %c0_i32_0 = arith.constant 0 : i32
    %c0_i32_1 = arith.constant 0 : i32
    return %c0_i32, %c0_i32_0 : i32, i32
  }
  func.func @transform_6(%arg0: i32) -> (i32, i32) {
    %c0_i32 = arith.constant 0 : i32
    %c0_i32_0 = arith.constant 0 : i32
    %c0_i32_1 = arith.constant 0 : i32
    return %c0_i32, %c0_i32_0 : i32, i32
  }
  func.func @transform_7(%arg0: i32) -> (i32, i32) {
    %c0_i32 = arith.constant 0 : i32
    %c0_i32_0 = arith.constant 0 : i32
    return %c0_i32, %arg0 : i32, i32
  }
  func.func @transform_8(%arg0: i32) -> (i32, i32) {
    %c0_i32 = arith.constant 0 : i32
    %c0_i32_0 = arith.constant 0 : i32
    return %c0_i32, %arg0 : i32, i32
  }
  func.func @transform_9(%arg0: i32) -> (i32, i32) {
    %c0_i32 = arith.constant 0 : i32
    %c0_i32_0 = arith.constant 0 : i32
    return %c0_i32, %arg0 : i32, i32
  }
  func.func @transform_10(%arg0: i32) -> (i32, i32) {
    %c0_i32 = arith.constant 0 : i32
    %c0_i32_0 = arith.constant 0 : i32
    return %c0_i32, %arg0 : i32, i32
  }
  func.func @transform_11(%arg0: i32) -> (i32, i32) {
    %c0_i32 = arith.constant 0 : i32
    %c0_i32_0 = arith.constant 0 : i32
    return %c0_i32, %arg0 : i32, i32
  }
  func.func @transform_12(%arg0: i32) -> (i32, i32) {
    %c0_i32 = arith.constant 0 : i32
    %c0_i32_0 = arith.constant 0 : i32
    return %c0_i32, %arg0 : i32, i32
  }
}

</mosaic_0001>

<llo_original>
// kernel: pd_unfolding_forward.1
$region0: #{pd_unfolding_forward.1}
  #allocation0 [shape = 'u32[]', space=smem, size = 0x4, offset = 0x4, fixed_abs, tag = 'smem constant byte address 0x4 - core index']
  #allocation1 [shape = 'u32[144,128]{1,0:T(1,128)}', space=vmem, size = 0x12000, scoped, tag = 'internal scratch']
  %s0 = inlined_call_operand.vmem [shape: f32[2], index: 0, kind: input, shape index: {}]
  %s1 = inlined_call_operand.vmem [shape: f32[32,8], index: 1, kind: input, shape index: {}]
  %s2 = inlined_call_operand.vmem [shape: f32[32,4], index: 2, kind: input, shape index: {}]
  %s3 = inlined_call_operand.vmem [shape: f32[32,1], index: 3, kind: input, shape index: {}]
  %s4 = inlined_call_operand.vmem [shape: f32[8,8], index: 4, kind: input, shape index: {}]
  %s5 = inlined_call_operand.vmem [shape: f32[8,4], index: 5, kind: input, shape index: {}]
  %s6 = inlined_call_operand.vmem [shape: f32[8,32], index: 6, kind: input, shape index: {}]
  %s7 = inlined_call_operand.vmem [shape: f32[8,500], index: 7, kind: input, shape index: {}]
  %s8 = inlined_call_operand.vmem [shape: f32[8,500], index: 8, kind: input, shape index: {}]
  %s9 = inlined_call_operand.vmem [shape: f32[4,500], index: 9, kind: input, shape index: {}]
  %s10 = inlined_call_operand.vmem [shape: f32[32,500], index: 10, kind: input, shape index: {}]
  %s11 = inlined_call_operand.hbm [shape: f32[8,500], index: 11, kind: output, shape index: {0}]
  %s12 = inlined_call_operand.hbm [shape: f32[32,500], index: 12, kind: output, shape index: {1}]
  %13 = xla_tuple %s11, %s12
  %s14 = sld [smem:[#allocation0]]
  $region112: #{pd_unfolding_forward.1} parent=0
    _
  %s16 = ssub.s32 1, %s14
  %s17 = scalar_select 0, %s16, %s14
  $region1: #{pd_unfolding_forward.1} parent=0
    #allocation2 [shape = 'u8[512]{0}', space=smem, size = 0x200, scoped, tag = 'input window, operand 0, single buffered']
    #allocation3 [shape = 's32[2]{0}', space=sflag, size = 0x8, scoped, tag = 'scoped memory for pd_unfolding_forward.1']
    #allocation4 [shape = 's32[2]{0}', space=sflag, size = 0x8, scoped, tag = 'scoped memory for pd_unfolding_forward.1']
    #allocation5 [shape = 'u8[65536]{0}', space=vmem, size = 0x10000, scoped, tag = 'input window, operand 10']
    #allocation6 [shape = 'u8[16384]{0}', space=vmem, size = 0x4000, scoped, tag = 'output window, operand 0']
    #allocation7 [shape = 'u8[65536]{0}', space=vmem, size = 0x10000, scoped, tag = 'output window, operand 1']
    #allocation8 [shape = 's32[2]{0}', space=sflag, size = 0x8, scoped, tag = 'scoped memory for pd_unfolding_forward.1']
    %18 = vsyncpa [#allocation4], 0
    %19 = vsyncpa [#allocation3], 0
    %s20 = scalar_lea.sflag [#allocation3], 1
    %21 = vsyncpa %s20, 0
    %22 = vsyncpa [#allocation8], 0
    %s23 = scalar_lea.sflag [#allocation8], 1
    %24 = vsyncpa %s23, 0
    loop: start=0, step=1, limit=4
    $region2: #{pd_unfolding_forward.1} parent=1 // loop_pre_header
      _
    $region3: #{pd_unfolding_forward.1} parent=1 // loop_header
      %s26 = sphi 0, %s30
      %p27 = scmp.ge.s32.totalorder %s26, 4
      %s34 = sphi 0, %s34
      %s36 = sphi 0, %s34
      %s37 = sphi 0, %s36
      %s51 = sphi 0, %s37
      %s55 = sphi 0, %s55
      %s57 = sphi 0, %s55
      %s58 = sphi 0, %s57
      %s72 = sphi 0, %s58
      %s76 = sphi 0, %s76
      %s78 = sphi 0, %s76
      %s79 = sphi 0, %s78
      %s93 = sphi 0, %s79
      %s97 = sphi 0, %s97
      %s99 = sphi 0, %s97
      %s100 = sphi 0, %s99
      %s114 = sphi 0, %s100
      %s118 = sphi 0, %s118
      %s120 = sphi 0, %s118
      %s121 = sphi 0, %s120
      %s135 = sphi 0, %s121
      %s139 = sphi 0, %s139
      %s141 = sphi 0, %s139
      %s142 = sphi 0, %s141
      %s156 = sphi 0, %s142
      %s160 = sphi 0, %s160
      %s162 = sphi 0, %s160
      %s163 = sphi 0, %s162
      %s177 = sphi 0, %s163
      %s183 = sphi 0, %s185
      %s186 = sphi 0, %s183
      %s187 = sphi 0, %s186
      %s203 = sphi 0, %s187
      %s209 = sphi 0, %s211
      %s212 = sphi 0, %s209
      %s213 = sphi 0, %s212
      %s229 = sphi 0, %s213
      %s235 = sphi 0, %s237
      %s238 = sphi 0, %s235
      %s239 = sphi 0, %s238
      %s255 = sphi 0, %s239
      %s261 = sphi 0, %s263
      %s264 = sphi 0, %s261
      %s265 = sphi 0, %s264
      %s281 = sphi 0, %s265
      %s287 = sphi 0, %s289
      %s290 = sphi 0, %s287
      %s291 = sphi 0, %s290
      %s307 = sphi 0, %s291
      %s313 = sphi 0, %s315
      %s316 = sphi 0, %s313
      %s317 = sphi 0, %s316
      %s333 = sphi 0, %s317
    $region4: #{pd_unfolding_forward.1} parent=1 // loop_header_branch
      %29 = sbr.rel (%p27) target = $region8
    $region5: #{pd_unfolding_forward.1} parent=1 // loop_body
      %s31 = ssub.s32 %s26, 1
      %s32 = ssub.s32 %s26, 2
      %s33 = sadd.s32 %s26, 1
      %s35 = sadd.s32 %s34, 1
      %p38 = scmp.eq.s32.totalorder %s26, 1
      %p39 = scmp.ne.s32.totalorder %s34, %s36
      %p40 = scmp.eq.s32.totalorder %s26, 0
      %p41 = por %p39, %p40
      %p42 = scmp.ne.s32.totalorder %s34, %s36
      %p43 = scmp.eq.s32.totalorder %s31, 1
      %p44 = por %p42, %p43
      %p45 = scmp.ne.s32.totalorder %s36, %s37
      %p46 = scmp.eq.s32.totalorder %s31, 0
      %p47 = por %p45, %p46
      %p48 = scmp.ne.s32.totalorder %s36, %s37
      %p49 = scmp.eq.s32.totalorder %s32, 1
      %p50 = por %p48, %p49
      %p52 = scmp.ne.s32.totalorder %s37, %s51
      %p53 = scmp.eq.s32.totalorder %s32, 0
      %p54 = por %p52, %p53
      %s56 = sadd.s32 %s55, 1
      %p59 = scmp.eq.s32.totalorder %s26, 1
      %p60 = scmp.ne.s32.totalorder %s55, %s57
      %p61 = scmp.eq.s32.totalorder %s26, 0
      %p62 = por %p60, %p61
      %p63 = scmp.ne.s32.totalorder %s55, %s57
      %p64 = scmp.eq.s32.totalorder %s31, 1
      %p65 = por %p63, %p64
      %p66 = scmp.ne.s32.totalorder %s57, %s58
      %p67 = scmp.eq.s32.totalorder %s31, 0
      %p68 = por %p66, %p67
      %p69 = scmp.ne.s32.totalorder %s57, %s58
      %p70 = scmp.eq.s32.totalorder %s32, 1
      %p71 = por %p69, %p70
      %p73 = scmp.ne.s32.totalorder %s58, %s72
      %p74 = scmp.eq.s32.totalorder %s32, 0
      %p75 = por %p73, %p74
      %s77 = sadd.s32 %s76, 1
      %p80 = scmp.eq.s32.totalorder %s26, 1
      %p81 = scmp.ne.s32.totalorder %s76, %s78
      %p82 = scmp.eq.s32.totalorder %s26, 0
      %p83 = por %p81, %p82
      %p84 = scmp.ne.s32.totalorder %s76, %s78
      %p85 = scmp.eq.s32.totalorder %s31, 1
      %p86 = por %p84, %p85
      %p87 = scmp.ne.s32.totalorder %s78, %s79
      %p88 = scmp.eq.s32.totalorder %s31, 0
      %p89 = por %p87, %p88
      %p90 = scmp.ne.s32.totalorder %s78, %s79
      %p91 = scmp.eq.s32.totalorder %s32, 1
      %p92 = por %p90, %p91
      %p94 = scmp.ne.s32.totalorder %s79, %s93
      %p95 = scmp.eq.s32.totalorder %s32, 0
      %p96 = por %p94, %p95
      %s98 = sadd.s32 %s97, 1
      %p101 = scmp.eq.s32.totalorder %s26, 1
      %p102 = scmp.ne.s32.totalorder %s97, %s99
      %p103 = scmp.eq.s32.totalorder %s26, 0
      %p104 = por %p102, %p103
      %p105 = scmp.ne.s32.totalorder %s97, %s99
      %p106 = scmp.eq.s32.totalorder %s31, 1
      %p107 = por %p105, %p106
      %p108 = scmp.ne.s32.totalorder %s99, %s100
      %p109 = scmp.eq.s32.totalorder %s31, 0
      %p110 = por %p108, %p109
      %p111 = scmp.ne.s32.totalorder %s99, %s100
      %p112 = scmp.eq.s32.totalorder %s32, 1
      %p113 = por %p111, %p112
      %p115 = scmp.ne.s32.totalorder %s100, %s114
      %p116 = scmp.eq.s32.totalorder %s32, 0
      %p117 = por %p115, %p116
      %s119 = sadd.s32 %s118, 1
      %p122 = scmp.eq.s32.totalorder %s26, 1
      %p123 = scmp.ne.s32.totalorder %s118, %s120
      %p124 = scmp.eq.s32.totalorder %s26, 0
      %p125 = por %p123, %p124
      %p126 = scmp.ne.s32.totalorder %s118, %s120
      %p127 = scmp.eq.s32.totalorder %s31, 1
      %p128 = por %p126, %p127
      %p129 = scmp.ne.s32.totalorder %s120, %s121
      %p130 = scmp.eq.s32.totalorder %s31, 0
      %p131 = por %p129, %p130
      %p132 = scmp.ne.s32.totalorder %s120, %s121
      %p133 = scmp.eq.s32.totalorder %s32, 1
      %p134 = por %p132, %p133
      %p136 = scmp.ne.s32.totalorder %s121, %s135
      %p137 = scmp.eq.s32.totalorder %s32, 0
      %p138 = por %p136, %p137
      %s140 = sadd.s32 %s139, 1
      %p143 = scmp.eq.s32.totalorder %s26, 1
      %p144 = scmp.ne.s32.totalorder %s139, %s141
      %p145 = scmp.eq.s32.totalorder %s26, 0
      %p146 = por %p144, %p145
      %p147 = scmp.ne.s32.totalorder %s139, %s141
      %p148 = scmp.eq.s32.totalorder %s31, 1
      %p149 = por %p147, %p148
      %p150 = scmp.ne.s32.totalorder %s141, %s142
      %p151 = scmp.eq.s32.totalorder %s31, 0
      %p152 = por %p150, %p151
      %p153 = scmp.ne.s32.totalorder %s141, %s142
      %p154 = scmp.eq.s32.totalorder %s32, 1
      %p155 = por %p153, %p154
      %p157 = scmp.ne.s32.totalorder %s142, %s156
      %p158 = scmp.eq.s32.totalorder %s32, 0
      %p159 = por %p157, %p158
      %s161 = sadd.s32 %s160, 1
      %p164 = scmp.eq.s32.totalorder %s26, 1
      %p165 = scmp.ne.s32.totalorder %s160, %s162
      %p166 = scmp.eq.s32.totalorder %s26, 0
      %p167 = por %p165, %p166
      %p168 = scmp.ne.s32.totalorder %s160, %s162
      %p169 = scmp.eq.s32.totalorder %s31, 1
      %p170 = por %p168, %p169
      %p171 = scmp.ne.s32.totalorder %s162, %s163
      %p172 = scmp.eq.s32.totalorder %s31, 0
      %p173 = por %p171, %p172
      %p174 = scmp.ne.s32.totalorder %s162, %s163
      %p175 = scmp.eq.s32.totalorder %s32, 1
      %p176 = por %p174, %p175
      %p178 = scmp.ne.s32.totalorder %s163, %s177
      %p179 = scmp.eq.s32.totalorder %s32, 0
      %p180 = por %p178, %p179
      %s181 = ssub.s32 %s26, %s33
      %p182 = scmp.eq.s32.totalorder %s181, 0
      %s184 = sadd.s32 %s183, 1
      %s185 = scalar_select %p182, %s183, %s184
      %p188 = pneg %p182
      %p189 = scmp.eq.s32.totalorder %s26, 1
      %p190 = por %p188, %p189
      %p191 = scmp.ne.s32.totalorder %s183, %s186
      %p192 = scmp.eq.s32.totalorder %s26, 0
      %p193 = por %p191, %p192
      %p194 = scmp.ne.s32.totalorder %s183, %s186
      %p195 = scmp.eq.s32.totalorder %s31, 1
      %p196 = por %p194, %p195
      %p197 = scmp.ne.s32.totalorder %s186, %s187
      %p198 = scmp.eq.s32.totalorder %s31, 0
      %p199 = por %p197, %p198
      %p200 = scmp.ne.s32.totalorder %s186, %s187
      %p201 = scmp.eq.s32.totalorder %s32, 1
      %p202 = por %p200, %p201
      %p204 = scmp.ne.s32.totalorder %s187, %s203
      %p205 = scmp.eq.s32.totalorder %s32, 0
      %p206 = por %p204, %p205
      %s207 = ssub.s32 %s26, %s33
      %p208 = scmp.eq.s32.totalorder %s207, 0
      %s210 = sadd.s32 %s209, 1
      %s211 = scalar_select %p208, %s209, %s210
      %p214 = pneg %p208
      %p215 = scmp.eq.s32.totalorder %s26, 1
      %p216 = por %p214, %p215
      %p217 = scmp.ne.s32.totalorder %s209, %s212
      %p218 = scmp.eq.s32.totalorder %s26, 0
      %p219 = por %p217, %p218
      %p220 = scmp.ne.s32.totalorder %s209, %s212
      %p221 = scmp.eq.s32.totalorder %s31, 1
      %p222 = por %p220, %p221
      %p223 = scmp.ne.s32.totalorder %s212, %s213
      %p224 = scmp.eq.s32.totalorder %s31, 0
      %p225 = por %p223, %p224
      %p226 = scmp.ne.s32.totalorder %s212, %s213
      %p227 = scmp.eq.s32.totalorder %s32, 1
      %p228 = por %p226, %p227
      %p230 = scmp.ne.s32.totalorder %s213, %s229
      %p231 = scmp.eq.s32.totalorder %s32, 0
      %p232 = por %p230, %p231
      %s233 = ssub.s32 %s26, %s33
      %p234 = scmp.eq.s32.totalorder %s233, 0
      %s236 = sadd.s32 %s235, 1
      %s237 = scalar_select %p234, %s235, %s236
      %p240 = pneg %p234
      %p241 = scmp.eq.s32.totalorder %s26, 1
      %p242 = por %p240, %p241
      %p243 = scmp.ne.s32.totalorder %s235, %s238
      %p244 = scmp.eq.s32.totalorder %s26, 0
      %p245 = por %p243, %p244
      %p246 = scmp.ne.s32.totalorder %s235, %s238
      %p247 = scmp.eq.s32.totalorder %s31, 1
      %p248 = por %p246, %p247
      %p249 = scmp.ne.s32.totalorder %s238, %s239
      %p250 = scmp.eq.s32.totalorder %s31, 0
      %p251 = por %p249, %p250
      %p252 = scmp.ne.s32.totalorder %s238, %s239
      %p253 = scmp.eq.s32.totalorder %s32, 1
      %p254 = por %p252, %p253
      %p256 = scmp.ne.s32.totalorder %s239, %s255
      %p257 = scmp.eq.s32.totalorder %s32, 0
      %p258 = por %p256, %p257
      %s259 = ssub.s32 %s26, %s33
      %p260 = scmp.eq.s32.totalorder %s259, 0
      %s262 = sadd.s32 %s261, 1
      %s263 = scalar_select %p260, %s261, %s262
      %p266 = pneg %p260
      %p267 = scmp.eq.s32.totalorder %s26, 1
      %p268 = por %p266, %p267
      %p269 = scmp.ne.s32.totalorder %s261, %s264
      %p270 = scmp.eq.s32.totalorder %s26, 0
      %p271 = por %p269, %p270
      %p272 = scmp.ne.s32.totalorder %s261, %s264
      %p273 = scmp.eq.s32.totalorder %s31, 1
      %p274 = por %p272, %p273
      %p275 = scmp.ne.s32.totalorder %s264, %s265
      %p276 = scmp.eq.s32.totalorder %s31, 0
      %p277 = por %p275, %p276
      %p278 = scmp.ne.s32.totalorder %s264, %s265
      %p279 = scmp.eq.s32.totalorder %s32, 1
      %p280 = por %p278, %p279
      %p282 = scmp.ne.s32.totalorder %s265, %s281
      %p283 = scmp.eq.s32.totalorder %s32, 0
      %p284 = por %p282, %p283
      %s285 = ssub.s32 %s26, %s33
      %p286 = scmp.eq.s32.totalorder %s285, 0
      %s288 = sadd.s32 %s287, 1
      %s289 = scalar_select %p286, %s287, %s288
      %p292 = pneg %p286
      %p293 = scmp.eq.s32.totalorder %s26, 1
      %p294 = por %p292, %p293
      %p295 = scmp.ne.s32.totalorder %s287, %s290
      %p296 = scmp.eq.s32.totalorder %s26, 0
      %p297 = por %p295, %p296
      %p298 = scmp.ne.s32.totalorder %s287, %s290
      %p299 = scmp.eq.s32.totalorder %s31, 1
      %p300 = por %p298, %p299
      %p301 = scmp.ne.s32.totalorder %s290, %s291
      %p302 = scmp.eq.s32.totalorder %s31, 0
      %p303 = por %p301, %p302
      %p304 = scmp.ne.s32.totalorder %s290, %s291
      %p305 = scmp.eq.s32.totalorder %s32, 1
      %p306 = por %p304, %p305
      %p308 = scmp.ne.s32.totalorder %s291, %s307
      %p309 = scmp.eq.s32.totalorder %s32, 0
      %p310 = por %p308, %p309
      %s311 = ssub.s32 %s26, %s33
      %p312 = scmp.eq.s32.totalorder %s311, 0
      %s314 = sadd.s32 %s313, 1
      %s315 = scalar_select %p312, %s313, %s314
      %p318 = pneg %p312
      %p319 = scmp.eq.s32.totalorder %s26, 1
      %p320 = por %p318, %p319
      %p321 = scmp.ne.s32.totalorder %s313, %s316
      %p322 = scmp.eq.s32.totalorder %s26, 0
      %p323 = por %p321, %p322
      %p324 = scmp.ne.s32.totalorder %s313, %s316
      %p325 = scmp.eq.s32.totalorder %s31, 1
      %p326 = por %p324, %p325
      %p327 = scmp.ne.s32.totalorder %s316, %s317
      %p328 = scmp.eq.s32.totalorder %s31, 0
      %p329 = por %p327, %p328
      %p330 = scmp.ne.s32.totalorder %s316, %s317
      %p331 = scmp.eq.s32.totalorder %s32, 1
      %p332 = por %p330, %p331
      %p334 = scmp.ne.s32.totalorder %s317, %s333
      %p335 = scmp.eq.s32.totalorder %s32, 0
      %p336 = por %p334, %p335
      %p337 = scmp.le.s32.totalorder 1, %s26
      %p338 = scmp.lt.s32.totalorder %s26, 3
      %p339 = pnand %p337, %p338
      %p340 = pneg %p339
      // Predicated region
      $region9: #{pd_unfolding_forward.1} parent=5 // pred_check
        _
      $region10: #{pd_unfolding_forward.1} parent=5 // pred_check_branch
        %342 = sbr.rel (%p339) target = $region12
      $region11: #{pd_unfolding_forward.1} parent=5 // pred_region
        %s343 = ssub.s32 %s26, 1
        // Predicated region
        $region13: #{pd_unfolding_forward.1} parent=11 // pred_check
          %p344 = pneg %p47
        $region14: #{pd_unfolding_forward.1} parent=11 // pred_check_branch
          %346 = sbr.rel (%p344) target = $region16
        $region15: #{pd_unfolding_forward.1} parent=11 // pred_region
          %s348 = ssub.s32 16, 16
          %349 = vsyncadd [#allocation4], %s348
          %s351 = sshll.u32 %s0, 4
          %s352 = int_to_ptr.vmem [resolvable:$true] %s351
          %354 = dma.vmem_to_smem %s352, 16, [#allocation2], [#allocation4]
        $region16: #{pd_unfolding_forward.1} parent=11 // pred_fallthru
          _
        // Predicated region
        $region17: #{pd_unfolding_forward.1} parent=11 // pred_check
          %p355 = pneg %p68
        $region18: #{pd_unfolding_forward.1} parent=11 // pred_check_branch
          %357 = sbr.rel (%p355) target = $region20
        $region19: #{pd_unfolding_forward.1} parent=11 // pred_region
          _
        $region20: #{pd_unfolding_forward.1} parent=11 // pred_fallthru
          _
        // Predicated region
        $region21: #{pd_unfolding_forward.1} parent=11 // pred_check
          %p358 = pneg %p89
        $region22: #{pd_unfolding_forward.1} parent=11 // pred_check_branch
          %360 = sbr.rel (%p358) target = $region24
        $region23: #{pd_unfolding_forward.1} parent=11 // pred_region
          _
        $region24: #{pd_unfolding_forward.1} parent=11 // pred_fallthru
          _
        // Predicated region
        $region25: #{pd_unfolding_forward.1} parent=11 // pred_check
          %p361 = pneg %p110
        $region26: #{pd_unfolding_forward.1} parent=11 // pred_check_branch
          %363 = sbr.rel (%p361) target = $region28
        $region27: #{pd_unfolding_forward.1} parent=11 // pred_region
          _
        $region28: #{pd_unfolding_forward.1} parent=11 // pred_fallthru
          _
        // Predicated region
        $region29: #{pd_unfolding_forward.1} parent=11 // pred_check
          %p364 = pneg %p131
        $region30: #{pd_unfolding_forward.1} parent=11 // pred_check_branch
          %366 = sbr.rel (%p364) target = $region32
        $region31: #{pd_unfolding_forward.1} parent=11 // pred_region
          _
        $region32: #{pd_unfolding_forward.1} parent=11 // pred_fallthru
          _
        // Predicated region
        $region33: #{pd_unfolding_forward.1} parent=11 // pred_check
          %p367 = pneg %p152
        $region34: #{pd_unfolding_forward.1} parent=11 // pred_check_branch
          %369 = sbr.rel (%p367) target = $region36
        $region35: #{pd_unfolding_forward.1} parent=11 // pred_region
          _
        $region36: #{pd_unfolding_forward.1} parent=11 // pred_fallthru
          _
        // Predicated region
        $region37: #{pd_unfolding_forward.1} parent=11 // pred_check
          %p370 = pneg %p173
        $region38: #{pd_unfolding_forward.1} parent=11 // pred_check_branch
          %372 = sbr.rel (%p370) target = $region40
        $region39: #{pd_unfolding_forward.1} parent=11 // pred_region
          _
        $region40: #{pd_unfolding_forward.1} parent=11 // pred_fallthru
          _
      $region12: #{pd_unfolding_forward.1} parent=5 // pred_fallthru
        _
      %p373 = scmp.lt.s32.totalorder %s26, 2
      // Predicated region
      $region41: #{pd_unfolding_forward.1} parent=5 // pred_check
        %p374 = pneg %p373
      $region42: #{pd_unfolding_forward.1} parent=5 // pred_check_branch
        %376 = sbr.rel (%p374) target = $region44
      $region43: #{pd_unfolding_forward.1} parent=5 // pred_region
        // Predicated region
        $region45: #{pd_unfolding_forward.1} parent=43 // pred_check
          %p377 = pneg %p193
        $region46: #{pd_unfolding_forward.1} parent=43 // pred_check_branch
          %379 = sbr.rel (%p377) target = $region48
        $region47: #{pd_unfolding_forward.1} parent=43 // pred_region
          %s380 = smul.u32 2, %s26
          %p381 = scmp.lt.s32.totalorder %s380, 3
          %s382 = scalar_select %p381, %s380, 3
          %s383 = smul.addr %s382, 8
          %s384 = scalar_lea.vmem %s7, %s383
          %s385 = smul.u32 2, %s26
        $region48: #{pd_unfolding_forward.1} parent=43 // pred_fallthru
          _
        // Predicated region
        $region49: #{pd_unfolding_forward.1} parent=43 // pred_check
          %p386 = pneg %p219
        $region50: #{pd_unfolding_forward.1} parent=43 // pred_check_branch
          %388 = sbr.rel (%p386) target = $region52
        $region51: #{pd_unfolding_forward.1} parent=43 // pred_region
          %s389 = smul.u32 2, %s26
          %p390 = scmp.lt.s32.totalorder %s389, 3
          %s391 = scalar_select %p390, %s389, 3
          %s392 = smul.addr %s391, 8
          %s393 = scalar_lea.vmem %s8, %s392
          %s394 = smul.u32 2, %s26
        $region52: #{pd_unfolding_forward.1} parent=43 // pred_fallthru
          _
        // Predicated region
        $region53: #{pd_unfolding_forward.1} parent=43 // pred_check
          %p395 = pneg %p245
        $region54: #{pd_unfolding_forward.1} parent=43 // pred_check_branch
          %397 = sbr.rel (%p395) target = $region56
        $region55: #{pd_unfolding_forward.1} parent=43 // pred_region
          %s398 = smul.u32 2, %s26
          %p399 = scmp.lt.s32.totalorder %s398, 3
          %s400 = scalar_select %p399, %s398, 3
          %s401 = smul.addr %s400, 4
          %s402 = scalar_lea.vmem %s9, %s401
          %s403 = smul.u32 2, %s26
        $region56: #{pd_unfolding_forward.1} parent=43 // pred_fallthru
          _
        // Predicated region
        $region57: #{pd_unfolding_forward.1} parent=43 // pred_check
          %p404 = pneg %p271
        $region58: #{pd_unfolding_forward.1} parent=43 // pred_check_branch
          %406 = sbr.rel (%p404) target = $region60
        $region59: #{pd_unfolding_forward.1} parent=43 // pred_region
          %s407 = sand.u32 %s261, 1
          %s408 = sand.u32 %s261, 1
          %s409 = smul.addr %s408, 64
          %s410 = scalar_lea.vmem [#allocation5], %s409
          %s411 = smul.u32 2, %s26
          %s412 = smul.addr %s411, 8
          %s413 = scalar_lea.vmem %s10, %s412
          // Predicated region
          $region61: #{pd_unfolding_forward.1} parent=59 // pred_check
            _
          $region62: #{pd_unfolding_forward.1} parent=59 // pred_check_branch
            %415 = sbr.rel (0) target = $region64
          $region63: #{pd_unfolding_forward.1} parent=59 // pred_region
            // Predicated region
            $region65: #{pd_unfolding_forward.1} parent=63 // pred_check
              _
            $region66: #{pd_unfolding_forward.1} parent=63 // pred_check_branch
              %417 = sbr.rel (0) target = $region68
            $region67: #{pd_unfolding_forward.1} parent=63 // pred_region
              loop: start=0, step=1, limit=1
              $region69: #{pd_unfolding_forward.1} parent=67 // loop_pre_header
                _
              $region70: #{pd_unfolding_forward.1} parent=67 // loop_header
                %s419 = sphi 0, %s423
                %p420 = scmp.ge.s32.totalorder %s419, 1
                %s424 = sphi %s413, %s413
                %s425 = sphi %s410, %s410
              $region71: #{pd_unfolding_forward.1} parent=67 // loop_header_branch
                %422 = sbr.rel (%p420) target = $region75
              $region72: #{pd_unfolding_forward.1} parent=67 // loop_body
                %v426 = vld [vmem:[%s424] sm:$0xff]
                %427 = vst [vmem:[%s425] sm:$0xff] %v426
                %v428 = vld [vmem:[%s424 + $0x8] sm:$0xff]
                %429 = vst [vmem:[%s425 + $0x8] sm:$0xff] %v428
                %v430 = vld [vmem:[%s424 + $0x20] sm:$0xff]
                %431 = vst [vmem:[%s425 + $0x10] sm:$0xff] %v430
                %v432 = vld [vmem:[%s424 + $0x28] sm:$0xff]
                %433 = vst [vmem:[%s425 + $0x18] sm:$0xff] %v432
                %v434 = vld [vmem:[%s424 + $0x40] sm:$0xff]
                %435 = vst [vmem:[%s425 + $0x20] sm:$0xff] %v434
                %v436 = vld [vmem:[%s424 + $0x48] sm:$0xff]
                %437 = vst [vmem:[%s425 + $0x28] sm:$0xff] %v436
                %v438 = vld [vmem:[%s424 + $0x60] sm:$0xff]
                %439 = vst [vmem:[%s425 + $0x30] sm:$0xff] %v438
                %v440 = vld [vmem:[%s424 + $0x68] sm:$0xff]
                %441 = vst [vmem:[%s425 + $0x38] sm:$0xff] %v440
              $region73: #{pd_unfolding_forward.1} parent=67 // loop_footer
                %s423 = sadd.s32 1, %s419
              $region74: #{pd_unfolding_forward.1} parent=67 // loop_footer_branch
                %418 = sbr.rel target = $region70
              $region75: #{pd_unfolding_forward.1} parent=67 // loop_exit
                _
            $region68: #{pd_unfolding_forward.1} parent=63 // pred_fallthru
              _
            // Predicated region
            $region76: #{pd_unfolding_forward.1} parent=63 // pred_check
              _
            $region77: #{pd_unfolding_forward.1} parent=63 // pred_check_branch
              %443 = sbr.rel target = $region79
            $region78: #{pd_unfolding_forward.1} parent=63 // pred_region
              _
            $region79: #{pd_unfolding_forward.1} parent=63 // pred_fallthru
              _
          $region64: #{pd_unfolding_forward.1} parent=59 // pred_fallthru
            _
          %444 = vnop
        $region60: #{pd_unfolding_forward.1} parent=43 // pred_fallthru
          _
      $region44: #{pd_unfolding_forward.1} parent=5 // pred_fallthru
        _
      %p445 = scmp.le.s32.totalorder 1, %s26
      %p446 = scmp.lt.s32.totalorder %s26, 3
      %p447 = pnand %p445, %p446
      %p448 = pneg %p447
      // Predicated region
      $region80: #{pd_unfolding_forward.1} parent=5 // pred_check
        _
      $region81: #{pd_unfolding_forward.1} parent=5 // pred_check_branch
        %450 = sbr.rel (%p447) target = $region83
      $region82: #{pd_unfolding_forward.1} parent=5 // pred_region
        %s451 = ssub.s32 %s26, 1
        // Predicated region
        $region84: #{pd_unfolding_forward.1} parent=82 // pred_check
          %p452 = pneg %p47
        $region85: #{pd_unfolding_forward.1} parent=82 // pred_check_branch
          %454 = sbr.rel (%p452) target = $region87
        $region86: #{pd_unfolding_forward.1} parent=82 // pred_region
          %455 = dma.done [#allocation4], 16
        $region87: #{pd_unfolding_forward.1} parent=82 // pred_fallthru
          _
        %s456 = sand.u32 %s264, 1
        %s457 = sand.u32 %s264, 1
        %s458 = smul.addr %s457, 64
        %s459 = scalar_lea.vmem [#allocation5], %s458
        // Predicated region
        $region88: #{pd_unfolding_forward.1} parent=82 // pred_check
          %p460 = pneg %p277
        $region89: #{pd_unfolding_forward.1} parent=82 // pred_check_branch
          %462 = sbr.rel (%p460) target = $region91
        $region90: #{pd_unfolding_forward.1} parent=82 // pred_region
          _
        $region91: #{pd_unfolding_forward.1} parent=82 // pred_fallthru
          _
        %463 = sfence
        %p464 = pneg %p47
        %p465 = pneg %p44
        %p466 = pneg %p68
        %p467 = pneg %p65
        %p468 = pneg %p89
        %p469 = pneg %p86
        %p470 = pneg %p110
        %p471 = pneg %p107
        %p472 = pneg %p131
        %p473 = pneg %p128
        %p474 = pneg %p152
        %p475 = pneg %p149
        %p476 = pneg %p173
        %p477 = pneg %p170
        %s478 = smul.u32 2, %s31
        %p479 = scmp.lt.s32.totalorder %s478, 3
        %s480 = scalar_select %p479, %s478, 3
        %s481 = smul.addr %s480, 8
        %s482 = scalar_lea.vmem %s7, %s481
        %p483 = pneg %p199
        %p484 = pneg %p196
        %s485 = smul.u32 2, %s31
        %p486 = scmp.lt.s32.totalorder %s485, 3
        %s487 = scalar_select %p486, %s485, 3
        %s488 = smul.addr %s487, 8
        %s489 = scalar_lea.vmem %s8, %s488
        %p490 = pneg %p225
        %p491 = pneg %p222
        %s492 = smul.u32 2, %s31
        %p493 = scmp.lt.s32.totalorder %s492, 3
        %s494 = scalar_select %p493, %s492, 3
        %s495 = smul.addr %s494, 4
        %s496 = scalar_lea.vmem %s9, %s495
        %p497 = pneg %p251
        %p498 = pneg %p248
        %s499 = sand.u32 %s264, 1
        %s500 = sand.u32 %s264, 1
        %s501 = smul.addr %s500, 64
        %s502 = scalar_lea.vmem [#allocation5], %s501
        %p503 = pneg %p277
        %p504 = pneg %p274
        %p505 = pneg %p303
        %p506 = pneg %p300
        %s507 = sand.u32 %s290, 1
        %s508 = scalar_lea.sflag [#allocation3], %s507
        %s509 = sand.u32 %s290, 1
        %s510 = smul.addr %s509, 16
        %s511 = scalar_lea.vmem [#allocation6], %s510
        %p512 = pneg %p329
        %p513 = pneg %p326
        %s514 = sand.u32 %s316, 1
        %s515 = scalar_lea.sflag [#allocation8], %s514
        %s516 = sand.u32 %s316, 1
        %s517 = smul.addr %s516, 64
        %s518 = scalar_lea.vmem [#allocation7], %s517
        %s519 = smul.u32 2, %s31
        %p520 = scmp.lt.s32.totalorder %s519, 3
        %s521 = scalar_select %p520, %s519, 3
        %s522 = smul.addr %s521, 8
        %s523 = scalar_lea.vmem %s7, %s522
        %s524 = smul.u32 2, %s31
        %s525 = smul.u32 2, %s31
        %p526 = scmp.lt.s32.totalorder %s525, 3
        %s527 = scalar_select %p526, %s525, 3
        %s528 = smul.addr %s527, 8
        %s529 = scalar_lea.vmem %s8, %s528
        %s530 = smul.u32 2, %s31
        %s531 = smul.u32 2, %s31
        %p532 = scmp.lt.s32.totalorder %s531, 3
        %s533 = scalar_select %p532, %s531, 3
        %s534 = smul.addr %s533, 4
        %s535 = scalar_lea.vmem %s9, %s534
        %s536 = smul.u32 2, %s31
        %s537 = smul.u32 2, %s31
        %s538 = smul.u32 2, %s31
        %s539 = smul.u32 2, %s31
        %v540 = vld [vmem:[%s529] sm:$0xff]
        %v541 = vld [vmem:[%s529 + $0x8] sm:$0xff]
        %v542 = vmul.f32 %v540, 2.0
        %v543 = vmul.f32 %v541, 2.0
        %v544 = vld [vmem:[%s523] sm:$0xff]
        %v545 = vld [vmem:[%s523 + $0x8] sm:$0xff]
        %v546 = vsub.f32 %v542, %v544
        %v547 = vsub.f32 %v543, %v545
        %v548 = vld [vmem:[%s535] sm:$0xff]
        %v549 = vld [vmem:[%s459] sm:$0xff]
        %v550 = vld [vmem:[%s459 + $0x8] sm:$0xff]
        %v551 = vld [vmem:[%s459 + $0x10] sm:$0xff]
        %v552 = vld [vmem:[%s459 + $0x18] sm:$0xff]
        %v553 = vld [vmem:[%s459 + $0x20] sm:$0xff]
        %v554 = vld [vmem:[%s459 + $0x28] sm:$0xff]
        %v555 = vld [vmem:[%s459 + $0x30] sm:$0xff]
        %v556 = vld [vmem:[%s459 + $0x38] sm:$0xff]
        %v557 = vld [vmem:[%s1] sm:$0xff]
        %v558 = vld [vmem:[%s1 + $0x8] sm:$0xff]
        %v559 = vld [vmem:[%s1 + $0x10] sm:$0xff]
        %v560 = vld [vmem:[%s1 + $0x18] sm:$0xff]
        %vm561 = vcmask 64512
        %v563 = vsel %vm561, %v557, 0
        %v566 = vsel %vm561, %v558, 0
        %v569 = vsel %vm561, %v559, 0
        %v572 = vsel %vm561, %v560, 0
        %574 = vmatprep.subr.mxu0 %v547
        %575 = vmatpush1.msra.mxu0 %v546
        %576 = vmatprep.subr.mxu0 0.0
        %577 = vmatpush1.msra.mxu0 0.0
        %578 = vmatprep.subr.mxu0 0.0
        %579 = vmatpush1.msra.mxu0 0.0
        %580 = vmatprep.subr.mxu0 0.0
        %581 = vmatpush1.msra.mxu0 0.0
        %582 = vmatprep.subr.mxu0 0.0
        %583 = vmatpush1.msra.mxu0 0.0
        %584 = vmatprep.subr.mxu0 0.0
        %585 = vmatpush1.msra.mxu0 0.0
        %586 = vmatprep.subr.mxu0 0.0
        %587 = vmatpush1.msra.mxu0 0.0
        %588 = vmatprep.subr.mxu0 0.0
        %589 = vmatpush1.msra.mxu0 0.0
        %590 = vmatprep.subr.mxu0 0.0
        %591 = vmatpush1.msra.mxu0 0.0
        %592 = vmatprep.subr.mxu0 0.0
        %593 = vmatpush1.msra.mxu0 0.0
        %594 = vmatprep.subr.mxu0 0.0
        %595 = vmatpush1.msra.mxu0 0.0
        %596 = vmatprep.subr.mxu0 0.0
        %597 = vmatpush1.msra.mxu0 0.0
        %598 = vmatprep.subr.mxu0 0.0
        %599 = vmatpush1.msra.mxu0 0.0
        %600 = vmatprep.subr.mxu0 0.0
        %601 = vmatpush1.msra.mxu0 0.0
        %602 = vmatprep.subr.mxu0 0.0
        %603 = vmatpush1.msra.mxu0 0.0
        %604 = vmatprep.subr.mxu0 0.0
        %605 = vmatpush1.msra.mxu0 0.0
        %606 = vmatprep.subr.mxu0 0.0
        %607 = vmatpush1.msra.mxu0 0.0
        %608 = vmatprep.subr.mxu0 0.0
        %609 = vmatpush1.msra.mxu0 0.0
        %610 = vmatprep.subr.mxu0 0.0
        %611 = vmatpush1.msra.mxu0 0.0
        %612 = vmatprep.subr.mxu0 0.0
        %613 = vmatpush1.msra.mxu0 0.0
        %614 = vmatprep.subr.mxu0 0.0
        %615 = vmatpush1.msra.mxu0 0.0
        %616 = vmatprep.subr.mxu0 0.0
        %617 = vmatpush1.msra.mxu0 0.0
        %618 = vmatprep.subr.mxu0 0.0
        %619 = vmatpush1.msra.mxu0 0.0
        %620 = vmatprep.subr.mxu0 0.0
        %621 = vmatpush1.msra.mxu0 0.0
        %622 = vmatprep.subr.mxu0 0.0
        %623 = vmatpush1.msra.mxu0 0.0
        %624 = vmatprep.subr.mxu0 0.0
        %625 = vmatpush1.msra.mxu0 0.0
        %626 = vmatprep.subr.mxu0 0.0
        %627 = vmatpush1.msra.mxu0 0.0
        %628 = vmatprep.subr.mxu0 0.0
        %629 = vmatpush1.msra.mxu0 0.0
        %630 = vmatprep.subr.mxu0 0.0
        %631 = vmatpush1.msra.mxu0 0.0
        %632 = vmatprep.subr.mxu0 0.0
        %633 = vmatpush1.msra.mxu0 0.0
        %634 = vmatprep.subr.mxu0 0.0
        %635 = vmatpush1.msra.mxu0 0.0
        %636 = vmatprep.subr.mxu0 0.0
        %637 = vmatpush1.msra.mxu0 0.0
        %638 = vmatprep.mubr.f32.mxu0 0.0
        %639 = vmatmul.mubr.f32.gmra.mrb[0].mxu0 %v563
        %v640 = vpop.f32.mrb[0].mxu0
        %v641 = vadd.f32 0.0, %v640
        %v642 = vpop.f32.mrb[0].mxu0
        %v643 = vadd.f32 0.0, %v642
        %644 = vmatprep.mubr.f32.mxu0 0.0
        %645 = vmatmul.mubr.f32.gmra.mrb[0].mxu0 %v566
        %v646 = vpop.f32.mrb[0].mxu0
        %v647 = vadd.f32 0.0, %v646
        %v648 = vpop.f32.mrb[0].mxu0
        %v649 = vadd.f32 0.0, %v648
        %650 = vmatprep.mubr.f32.mxu0 0.0
        %651 = vmatmul.mubr.f32.gmra.mrb[0].mxu0 %v569
        %v652 = vpop.f32.mrb[0].mxu0
        %v653 = vadd.f32 0.0, %v652
        %v654 = vpop.f32.mrb[0].mxu0
        %v655 = vadd.f32 0.0, %v654
        %656 = vmatprep.mubr.f32.mxu0 0.0
        %657 = vmatmul.mubr.f32.gmra.mrb[0].mxu0 %v572
        %v658 = vpop.f32.mrb[0].mxu0
        %v659 = vadd.f32 0.0, %v658
        %v660 = vpop.f32.mrb[0].mxu0
        %v661 = vadd.f32 0.0, %v660
        %662 = vdwg.mxu0
        %v663 = vadd.f32 %v549, %v641
        %v664 = vadd.f32 %v550, %v643
        %v665 = vadd.f32 %v551, %v647
        %v666 = vadd.f32 %v552, %v649
        %v667 = vadd.f32 %v553, %v653
        %v668 = vadd.f32 %v554, %v655
        %v669 = vadd.f32 %v555, %v659
        %v670 = vadd.f32 %v556, %v661
        %v671 = vld [vmem:[%s2] sm:$0xff]
        %v672 = vld [vmem:[%s2 + $0x8] sm:$0xff]
        %v673 = vld [vmem:[%s2 + $0x10] sm:$0xff]
        %v674 = vld [vmem:[%s2 + $0x18] sm:$0xff]
        %v676 = vcombine.high %v548, %v548
        %vm677 = vcmask 31744
        %v679 = vsel %vm677, %v671, 0
        %v682 = vsel %vm677, %v672, 0
        %v685 = vsel %vm677, %v673, 0
        %v688 = vsel %vm677, %v674, 0
        %vm690 = vcmask 1043456
        %v691 = vsel %vm690, %v548, 0
        %v693 = vsel %vm690, %v676, 0
        %695 = vmatprep.subr.mxu0 %v693
        %696 = vmatpush1.msra.mxu0 %v691
        %697 = vmatprep.subr.mxu0 0.0
        %698 = vmatpush1.msra.mxu0 0.0
        %699 = vmatprep.subr.mxu0 0.0
        %700 = vmatpush1.msra.mxu0 0.0
        %701 = vmatprep.subr.mxu0 0.0
        %702 = vmatpush1.msra.mxu0 0.0
        %703 = vmatprep.subr.mxu0 0.0
        %704 = vmatpush1.msra.mxu0 0.0
        %705 = vmatprep.subr.mxu0 0.0
        %706 = vmatpush1.msra.mxu0 0.0
        %707 = vmatprep.subr.mxu0 0.0
        %708 = vmatpush1.msra.mxu0 0.0
        %709 = vmatprep.subr.mxu0 0.0
        %710 = vmatpush1.msra.mxu0 0.0
        %711 = vmatprep.subr.mxu0 0.0
        %712 = vmatpush1.msra.mxu0 0.0
        %713 = vmatprep.subr.mxu0 0.0
        %714 = vmatpush1.msra.mxu0 0.0
        %715 = vmatprep.subr.mxu0 0.0
        %716 = vmatpush1.msra.mxu0 0.0
        %717 = vmatprep.subr.mxu0 0.0
        %718 = vmatpush1.msra.mxu0 0.0
        %719 = vmatprep.subr.mxu0 0.0
        %720 = vmatpush1.msra.mxu0 0.0
        %721 = vmatprep.subr.mxu0 0.0
        %722 = vmatpush1.msra.mxu0 0.0
        %723 = vmatprep.subr.mxu0 0.0
        %724 = vmatpush1.msra.mxu0 0.0
        %725 = vmatprep.subr.mxu0 0.0
        %726 = vmatpush1.msra.mxu0 0.0
        %727 = vmatprep.subr.mxu0 0.0
        %728 = vmatpush1.msra.mxu0 0.0
        %729 = vmatprep.subr.mxu0 0.0
        %730 = vmatpush1.msra.mxu0 0.0
        %731 = vmatprep.subr.mxu0 0.0
        %732 = vmatpush1.msra.mxu0 0.0
        %733 = vmatprep.subr.mxu0 0.0
        %734 = vmatpush1.msra.mxu0 0.0
        %735 = vmatprep.subr.mxu0 0.0
        %736 = vmatpush1.msra.mxu0 0.0
        %737 = vmatprep.subr.mxu0 0.0
        %738 = vmatpush1.msra.mxu0 0.0
        %739 = vmatprep.subr.mxu0 0.0
        %740 = vmatpush1.msra.mxu0 0.0
        %741 = vmatprep.subr.mxu0 0.0
        %742 = vmatpush1.msra.mxu0 0.0
        %743 = vmatprep.subr.mxu0 0.0
        %744 = vmatpush1.msra.mxu0 0.0
        %745 = vmatprep.subr.mxu0 0.0
        %746 = vmatpush1.msra.mxu0 0.0
        %747 = vmatprep.subr.mxu0 0.0
        %748 = vmatpush1.msra.mxu0 0.0
        %749 = vmatprep.subr.mxu0 0.0
        %750 = vmatpush1.msra.mxu0 0.0
        %751 = vmatprep.subr.mxu0 0.0
        %752 = vmatpush1.msra.mxu0 0.0
        %753 = vmatprep.subr.mxu0 0.0
        %754 = vmatpush1.msra.mxu0 0.0
        %755 = vmatprep.subr.mxu0 0.0
        %756 = vmatpush1.msra.mxu0 0.0
        %757 = vmatprep.subr.mxu0 0.0
        %758 = vmatpush1.msra.mxu0 0.0
        %759 = vmatprep.mubr.f32.mxu0 0.0
        %760 = vmatmul.mubr.f32.gmra.mrb[0].mxu0 %v679
        %v761 = vpop.f32.mrb[0].mxu0
        %v762 = vadd.f32 0.0, %v761
        %v763 = vpop.f32.mrb[0].mxu0
        %v764 = vadd.f32 0.0, %v763
        %765 = vmatprep.mubr.f32.mxu0 0.0
        %766 = vmatmul.mubr.f32.gmra.mrb[0].mxu0 %v682
        %v767 = vpop.f32.mrb[0].mxu0
        %v768 = vadd.f32 0.0, %v767
        %v769 = vpop.f32.mrb[0].mxu0
        %v770 = vadd.f32 0.0, %v769
        %771 = vmatprep.mubr.f32.mxu0 0.0
        %772 = vmatmul.mubr.f32.gmra.mrb[0].mxu0 %v685
        %v773 = vpop.f32.mrb[0].mxu0
        %v774 = vadd.f32 0.0, %v773
        %v775 = vpop.f32.mrb[0].mxu0
        %v776 = vadd.f32 0.0, %v775
        %777 = vmatprep.mubr.f32.mxu0 0.0
        %778 = vmatmul.mubr.f32.gmra.mrb[0].mxu0 %v688
        %v779 = vpop.f32.mrb[0].mxu0
        %v780 = vadd.f32 0.0, %v779
        %v781 = vpop.f32.mrb[0].mxu0
        %v782 = vadd.f32 0.0, %v781
        %783 = vdwg.mxu0
        %v784 = vadd.f32 %v663, %v762
        %v785 = vadd.f32 %v664, %v764
        %v786 = vadd.f32 %v665, %v768
        %v787 = vadd.f32 %v666, %v770
        %v788 = vadd.f32 %v667, %v774
        %v789 = vadd.f32 %v668, %v776
        %v790 = vadd.f32 %v669, %v780
        %v791 = vadd.f32 %v670, %v782
        %v792 = vld [vmem:[%s3] sm:$0xff]
        %v793 = vld [vmem:[%s3 + $0x8] sm:$0xff]
        %v794 = vld [vmem:[%s3 + $0x10] sm:$0xff]
        %v795 = vld [vmem:[%s3 + $0x18] sm:$0xff]
        %797 = vset.pattern.permute.xlu0 0
        %798 = vperm.xlu0 %797, %v792
        %v799 = vpop.permute.xlu0 %798
        %802 = vset.pattern.permute.xlu0 0
        %803 = vperm.xlu0 %802, %v793
        %v804 = vpop.permute.xlu0 %803
        %807 = vset.pattern.permute.xlu0 0
        %808 = vperm.xlu0 %807, %v794
        %v809 = vpop.permute.xlu0 %808
        %812 = vset.pattern.permute.xlu0 0
        %813 = vperm.xlu0 %812, %v795
        %v814 = vpop.permute.xlu0 %813
        %v816 = vadd.f32 %v784, %v799
        %v817 = vadd.f32 %v785, %v799
        %v818 = vadd.f32 %v786, %v804
        %v819 = vadd.f32 %v787, %v804
        %v820 = vadd.f32 %v788, %v809
        %v821 = vadd.f32 %v789, %v809
        %v822 = vadd.f32 %v790, %v814
        %v823 = vadd.f32 %v791, %v814
        %v824 = vmax.f32 %v816, 0.0
        %v825 = vmax.f32 %v817, 0.0
        %v826 = vmax.f32 %v818, 0.0
        %v827 = vmax.f32 %v819, 0.0
        %v828 = vmax.f32 %v820, 0.0
        %v829 = vmax.f32 %v821, 0.0
        %v830 = vmax.f32 %v822, 0.0
        %v831 = vmax.f32 %v823, 0.0
        %832 = vst [vmem:[%s518] sm:$0xff] %v824
        %833 = vst [vmem:[%s518 + $0x8] sm:$0xff] %v825
        %834 = vst [vmem:[%s518 + $0x10] sm:$0xff] %v826
        %835 = vst [vmem:[%s518 + $0x18] sm:$0xff] %v827
        %836 = vst [vmem:[%s518 + $0x20] sm:$0xff] %v828
        %837 = vst [vmem:[%s518 + $0x28] sm:$0xff] %v829
        %838 = vst [vmem:[%s518 + $0x30] sm:$0xff] %v830
        %839 = vst [vmem:[%s518 + $0x38] sm:$0xff] %v831
        %v840 = vld [vmem:[%s4] sm:$0xff]
        %v841 = vld [vmem:[%s5] sm:$0xff]
        %v843 = vsel %vm677, %v841, 0
        %845 = vmatprep.subr.mxu0 %v693
        %846 = vmatpush1.msra.mxu0 %v691
        %847 = vmatprep.subr.mxu0 0.0
        %848 = vmatpush1.msra.mxu0 0.0
        %849 = vmatprep.subr.mxu0 0.0
        %850 = vmatpush1.msra.mxu0 0.0
        %851 = vmatprep.subr.mxu0 0.0
        %852 = vmatpush1.msra.mxu0 0.0
        %853 = vmatprep.subr.mxu0 0.0
        %854 = vmatpush1.msra.mxu0 0.0
        %855 = vmatprep.subr.mxu0 0.0
        %856 = vmatpush1.msra.mxu0 0.0
        %857 = vmatprep.subr.mxu0 0.0
        %858 = vmatpush1.msra.mxu0 0.0
        %859 = vmatprep.subr.mxu0 0.0
        %860 = vmatpush1.msra.mxu0 0.0
        %861 = vmatprep.subr.mxu0 0.0
        %862 = vmatpush1.msra.mxu0 0.0
        %863 = vmatprep.subr.mxu0 0.0
        %864 = vmatpush1.msra.mxu0 0.0
        %865 = vmatprep.subr.mxu0 0.0
        %866 = vmatpush1.msra.mxu0 0.0
        %867 = vmatprep.subr.mxu0 0.0
        %868 = vmatpush1.msra.mxu0 0.0
        %869 = vmatprep.subr.mxu0 0.0
        %870 = vmatpush1.msra.mxu0 0.0
        %871 = vmatprep.subr.mxu0 0.0
        %872 = vmatpush1.msra.mxu0 0.0
        %873 = vmatprep.subr.mxu0 0.0
        %874 = vmatpush1.msra.mxu0 0.0
        %875 = vmatprep.subr.mxu0 0.0
        %876 = vmatpush1.msra.mxu0 0.0
        %877 = vmatprep.subr.mxu0 0.0
        %878 = vmatpush1.msra.mxu0 0.0
        %879 = vmatprep.subr.mxu0 0.0
        %880 = vmatpush1.msra.mxu0 0.0
        %881 = vmatprep.subr.mxu0 0.0
        %882 = vmatpush1.msra.mxu0 0.0
        %883 = vmatprep.subr.mxu0 0.0
        %884 = vmatpush1.msra.mxu0 0.0
        %885 = vmatprep.subr.mxu0 0.0
        %886 = vmatpush1.msra.mxu0 0.0
        %887 = vmatprep.subr.mxu0 0.0
        %888 = vmatpush1.msra.mxu0 0.0
        %889 = vmatprep.subr.mxu0 0.0
        %890 = vmatpush1.msra.mxu0 0.0
        %891 = vmatprep.subr.mxu0 0.0
        %892 = vmatpush1.msra.mxu0 0.0
        %893 = vmatprep.subr.mxu0 0.0
        %894 = vmatpush1.msra.mxu0 0.0
        %895 = vmatprep.subr.mxu0 0.0
        %896 = vmatpush1.msra.mxu0 0.0
        %897 = vmatprep.subr.mxu0 0.0
        %898 = vmatpush1.msra.mxu0 0.0
        %899 = vmatprep.subr.mxu0 0.0
        %900 = vmatpush1.msra.mxu0 0.0
        %901 = vmatprep.subr.mxu0 0.0
        %902 = vmatpush1.msra.mxu0 0.0
        %903 = vmatprep.subr.mxu0 0.0
        %904 = vmatpush1.msra.mxu0 0.0
        %905 = vmatprep.subr.mxu0 0.0
        %906 = vmatpush1.msra.mxu0 0.0
        %907 = vmatprep.subr.mxu0 0.0
        %908 = vmatpush1.msra.mxu0 0.0
        %909 = vmatprep.mubr.f32.mxu0 0.0
        %910 = vmatmul.mubr.f32.gmra.mrb[0].mxu0 %v843
        %v911 = vpop.f32.mrb[0].mxu0
        %v912 = vadd.f32 0.0, %v911
        %v913 = vpop.f32.mrb[0].mxu0
        %v914 = vadd.f32 0.0, %v913
        %915 = vdwg.mxu0
        %v917 = vsel %vm561, %v840, 0
        %919 = vmatprep.subr.mxu0 %v541
        %920 = vmatpush1.msra.mxu0 %v540
        %921 = vmatprep.subr.mxu0 0.0
        %922 = vmatpush1.msra.mxu0 0.0
        %923 = vmatprep.subr.mxu0 0.0
        %924 = vmatpush1.msra.mxu0 0.0
        %925 = vmatprep.subr.mxu0 0.0
        %926 = vmatpush1.msra.mxu0 0.0
        %927 = vmatprep.subr.mxu0 0.0
        %928 = vmatpush1.msra.mxu0 0.0
        %929 = vmatprep.subr.mxu0 0.0
        %930 = vmatpush1.msra.mxu0 0.0
        %931 = vmatprep.subr.mxu0 0.0
        %932 = vmatpush1.msra.mxu0 0.0
        %933 = vmatprep.subr.mxu0 0.0
        %934 = vmatpush1.msra.mxu0 0.0
        %935 = vmatprep.subr.mxu0 0.0
        %936 = vmatpush1.msra.mxu0 0.0
        %937 = vmatprep.subr.mxu0 0.0
        %938 = vmatpush1.msra.mxu0 0.0
        %939 = vmatprep.subr.mxu0 0.0
        %940 = vmatpush1.msra.mxu0 0.0
        %941 = vmatprep.subr.mxu0 0.0
        %942 = vmatpush1.msra.mxu0 0.0
        %943 = vmatprep.subr.mxu0 0.0
        %944 = vmatpush1.msra.mxu0 0.0
        %945 = vmatprep.subr.mxu0 0.0
        %946 = vmatpush1.msra.mxu0 0.0
        %947 = vmatprep.subr.mxu0 0.0
        %948 = vmatpush1.msra.mxu0 0.0
        %949 = vmatprep.subr.mxu0 0.0
        %950 = vmatpush1.msra.mxu0 0.0
        %951 = vmatprep.subr.mxu0 0.0
        %952 = vmatpush1.msra.mxu0 0.0
        %953 = vmatprep.subr.mxu0 0.0
        %954 = vmatpush1.msra.mxu0 0.0
        %955 = vmatprep.subr.mxu0 0.0
        %956 = vmatpush1.msra.mxu0 0.0
        %957 = vmatprep.subr.mxu0 0.0
        %958 = vmatpush1.msra.mxu0 0.0
        %959 = vmatprep.subr.mxu0 0.0
        %960 = vmatpush1.msra.mxu0 0.0
        %961 = vmatprep.subr.mxu0 0.0
        %962 = vmatpush1.msra.mxu0 0.0
        %963 = vmatprep.subr.mxu0 0.0
        %964 = vmatpush1.msra.mxu0 0.0
        %965 = vmatprep.subr.mxu0 0.0
        %966 = vmatpush1.msra.mxu0 0.0
        %967 = vmatprep.subr.mxu0 0.0
        %968 = vmatpush1.msra.mxu0 0.0
        %969 = vmatprep.subr.mxu0 0.0
        %970 = vmatpush1.msra.mxu0 0.0
        %971 = vmatprep.subr.mxu0 0.0
        %972 = vmatpush1.msra.mxu0 0.0
        %973 = vmatprep.subr.mxu0 0.0
        %974 = vmatpush1.msra.mxu0 0.0
        %975 = vmatprep.subr.mxu0 0.0
        %976 = vmatpush1.msra.mxu0 0.0
        %977 = vmatprep.subr.mxu0 0.0
        %978 = vmatpush1.msra.mxu0 0.0
        %979 = vmatprep.subr.mxu0 0.0
        %980 = vmatpush1.msra.mxu0 0.0
        %981 = vmatprep.subr.mxu0 0.0
        %982 = vmatpush1.msra.mxu0 0.0
        %983 = vmatprep.mubr.f32.mxu0 0.0
        %984 = vmatmul.mubr.f32.gmra.mrb[0].mxu0 %v917
        %v985 = vpop.f32.mrb[0].mxu0
        %v986 = vadd.f32 %v912, %v985
        %v987 = vpop.f32.mrb[0].mxu0
        %v988 = vadd.f32 %v914, %v987
        %989 = vdwg.mxu0
        %v990 = vld [vmem:[%s6] sm:$0xff]
        %vm991 = vcmask 261120
        %v993 = vsel %vm991, %v990, 0
        %995 = vmatprep.subr.mxu0 %v825
        %996 = vmatpush1.msra.mxu0 %v824
        %997 = vmatprep.subr.mxu0 %v827
        %998 = vmatpush1.msra.mxu0 %v826
        %999 = vmatprep.subr.mxu0 %v829
        %1000 = vmatpush1.msra.mxu0 %v828
        %1001 = vmatprep.subr.mxu0 %v831
        %1002 = vmatpush1.msra.mxu0 %v830
        %1003 = vmatprep.subr.mxu0 0.0
        %1004 = vmatpush1.msra.mxu0 0.0
        %1005 = vmatprep.subr.mxu0 0.0
        %1006 = vmatpush1.msra.mxu0 0.0
        %1007 = vmatprep.subr.mxu0 0.0
        %1008 = vmatpush1.msra.mxu0 0.0
        %1009 = vmatprep.subr.mxu0 0.0
        %1010 = vmatpush1.msra.mxu0 0.0
        %1011 = vmatprep.subr.mxu0 0.0
        %1012 = vmatpush1.msra.mxu0 0.0
        %1013 = vmatprep.subr.mxu0 0.0
        %1014 = vmatpush1.msra.mxu0 0.0
        %1015 = vmatprep.subr.mxu0 0.0
        %1016 = vmatpush1.msra.mxu0 0.0
        %1017 = vmatprep.subr.mxu0 0.0
        %1018 = vmatpush1.msra.mxu0 0.0
        %1019 = vmatprep.subr.mxu0 0.0
        %1020 = vmatpush1.msra.mxu0 0.0
        %1021 = vmatprep.subr.mxu0 0.0
        %1022 = vmatpush1.msra.mxu0 0.0
        %1023 = vmatprep.subr.mxu0 0.0
        %1024 = vmatpush1.msra.mxu0 0.0
        %1025 = vmatprep.subr.mxu0 0.0
        %1026 = vmatpush1.msra.mxu0 0.0
        %1027 = vmatprep.subr.mxu0 0.0
        %1028 = vmatpush1.msra.mxu0 0.0
        %1029 = vmatprep.subr.mxu0 0.0
        %1030 = vmatpush1.msra.mxu0 0.0
        %1031 = vmatprep.subr.mxu0 0.0
        %1032 = vmatpush1.msra.mxu0 0.0
        %1033 = vmatprep.subr.mxu0 0.0
        %1034 = vmatpush1.msra.mxu0 0.0
        %1035 = vmatprep.subr.mxu0 0.0
        %1036 = vmatpush1.msra.mxu0 0.0
        %1037 = vmatprep.subr.mxu0 0.0
        %1038 = vmatpush1.msra.mxu0 0.0
        %1039 = vmatprep.subr.mxu0 0.0
        %1040 = vmatpush1.msra.mxu0 0.0
        %1041 = vmatprep.subr.mxu0 0.0
        %1042 = vmatpush1.msra.mxu0 0.0
        %1043 = vmatprep.subr.mxu0 0.0
        %1044 = vmatpush1.msra.mxu0 0.0
        %1045 = vmatprep.subr.mxu0 0.0
        %1046 = vmatpush1.msra.mxu0 0.0
        %1047 = vmatprep.subr.mxu0 0.0
        %1048 = vmatpush1.msra.mxu0 0.0
        %1049 = vmatprep.subr.mxu0 0.0
        %1050 = vmatpush1.msra.mxu0 0.0
        %1051 = vmatprep.subr.mxu0 0.0
        %1052 = vmatpush1.msra.mxu0 0.0
        %1053 = vmatprep.subr.mxu0 0.0
        %1054 = vmatpush1.msra.mxu0 0.0
        %1055 = vmatprep.subr.mxu0 0.0
        %1056 = vmatpush1.msra.mxu0 0.0
        %1057 = vmatprep.subr.mxu0 0.0
        %1058 = vmatpush1.msra.mxu0 0.0
        %1059 = vmatprep.mubr.f32.mxu0 0.0
        %1060 = vmatmul.mubr.f32.gmra.mrb[0].mxu0 %v993
        %v1061 = vpop.f32.mrb[0].mxu0
        %v1062 = vadd.f32 0.0, %v1061
        %v1063 = vpop.f32.mrb[0].mxu0
        %v1064 = vadd.f32 0.0, %v1063
        %1065 = vdwg.mxu0
        %v1066 = vadd.f32 %v986, %v1062
        %v1067 = vadd.f32 %v988, %v1064
        %s1068 = sld [smem:[#allocation2]]
        %s1069 = sld [smem:[#allocation2 + $0x1]]
        %v1070 = vstv %s1068
        %v1071 = vmax.f32 %v1070, %v1066
        %v1072 = vmax.f32 %v1070, %v1067
        %v1073 = vstv %s1069
        %v1074 = vmin.f32 %v1073, %v1071
        %v1075 = vmin.f32 %v1073, %v1072
        %1076 = vst [vmem:[%s511] sm:$0xff] %v1074
        %1077 = vst [vmem:[%s511 + $0x8] sm:$0xff] %v1075
        %s1078 = sand.u32 %s290, 1
        %s1079 = scalar_lea.sflag [#allocation3], %s1078
        %s1080 = sand.u32 %s290, 1
        %s1081 = smul.addr %s1080, 16
        %s1082 = scalar_lea.vmem [#allocation6], %s1081
        %s1083 = sand.u32 %s316, 1
        %s1084 = scalar_lea.sflag [#allocation8], %s1083
        %s1085 = sand.u32 %s316, 1
        %s1086 = smul.addr %s1085, 64
        %s1087 = scalar_lea.vmem [#allocation7], %s1086
        // Predicated region
        $region92: #{pd_unfolding_forward.1} parent=82 // pred_check
          %p1088 = pneg %p300
        $region93: #{pd_unfolding_forward.1} parent=82 // pred_check_branch
          %1090 = sbr.rel (%p1088) target = $region95
        $region94: #{pd_unfolding_forward.1} parent=82 // pred_region
          %s1091 = smul.u32 2, %s31
          %s1093 = ssub.s32 256, 256
          %1094 = vsyncadd %s1079, %s1093
          %s1095 = smul.addr %s1091, 128
          %s1096 = scalar_lea.hbm %s11, %s1095
          %s1098 = sshll.u32 %s1082, 4
          %s1099 = int_to_ptr.vmem [resolvable:$true] %s1098
          %1101 = dma.vmem_to_hbm [thread:$0]  %s1099, 256, %s1096, %s1079
        $region95: #{pd_unfolding_forward.1} parent=82 // pred_fallthru
          _
        // Predicated region
        $region96: #{pd_unfolding_forward.1} parent=82 // pred_check
          %p1102 = pneg %p326
        $region97: #{pd_unfolding_forward.1} parent=82 // pred_check_branch
          %1104 = sbr.rel (%p1102) target = $region99
        $region98: #{pd_unfolding_forward.1} parent=82 // pred_region
          %s1105 = smul.u32 2, %s31
          %s1107 = ssub.s32 1024, 1024
          %1108 = vsyncadd %s1084, %s1107
          %s1109 = smul.addr %s1105, 128
          %s1110 = scalar_lea.hbm %s12, %s1109
          %s1111 = sshll.u32 %s1087, 4
          %s1112 = int_to_ptr.vmem [resolvable:$true] %s1111
          %1117 = dma.vmem_to_hbm [thread:$0]  %s1112, 1024, %s1110, %s1084, 256, 512, 16
        $region99: #{pd_unfolding_forward.1} parent=82 // pred_fallthru
          _
      $region83: #{pd_unfolding_forward.1} parent=5 // pred_fallthru
        _
      %p1118 = scmp.le.s32.totalorder 2, %s26
      // Predicated region
      $region100: #{pd_unfolding_forward.1} parent=5 // pred_check
        %p1119 = pneg %p1118
      $region101: #{pd_unfolding_forward.1} parent=5 // pred_check_branch
        %1121 = sbr.rel (%p1119) target = $region103
      $region102: #{pd_unfolding_forward.1} parent=5 // pred_region
        %s1122 = ssub.s32 %s26, 2
        // Predicated region
        $region104: #{pd_unfolding_forward.1} parent=102 // pred_check
          %p1123 = pneg %p306
        $region105: #{pd_unfolding_forward.1} parent=102 // pred_check_branch
          %1125 = sbr.rel (%p1123) target = $region107
        $region106: #{pd_unfolding_forward.1} parent=102 // pred_region
          %s1126 = sand.u32 %s291, 1
          %s1127 = scalar_lea.sflag [#allocation3], %s1126
          %s1128 = sand.u32 %s291, 1
          %s1129 = smul.addr %s1128, 16
          %s1130 = scalar_lea.vmem [#allocation6], %s1129
          %1131 = dma.done %s1127, 256
        $region107: #{pd_unfolding_forward.1} parent=102 // pred_fallthru
          _
        // Predicated region
        $region108: #{pd_unfolding_forward.1} parent=102 // pred_check
          %p1132 = pneg %p332
        $region109: #{pd_unfolding_forward.1} parent=102 // pred_check_branch
          %1134 = sbr.rel (%p1132) target = $region111
        $region110: #{pd_unfolding_forward.1} parent=102 // pred_region
          %s1135 = sand.u32 %s317, 1
          %s1136 = scalar_lea.sflag [#allocation8], %s1135
          %s1137 = sand.u32 %s317, 1
          %s1138 = smul.addr %s1137, 64
          %s1139 = scalar_lea.vmem [#allocation7], %s1138
          %1140 = dma.done %s1136, 1024
        $region111: #{pd_unfolding_forward.1} parent=102 // pred_fallthru
          _
      $region103: #{pd_unfolding_forward.1} parent=5 // pred_fallthru
        _
    $region6: #{pd_unfolding_forward.1} parent=1 // loop_footer
      %s30 = sadd.s32 1, %s26
    $region7: #{pd_unfolding_forward.1} parent=1 // loop_footer_branch
      %25 = sbr.rel target = $region3
    $region8: #{pd_unfolding_forward.1} parent=1 // loop_exit
      _
    %1141 = vsyncpa [#allocation3], 1
    %s1142 = scalar_lea.sflag [#allocation3], 1
    %1143 = vsyncpa %s1142, 1
    %1144 = vsyncpa [#allocation8], 1
    %s1145 = scalar_lea.sflag [#allocation8], 1
    %1146 = vsyncpa %s1145, 1
    %1147 = vsyncpa [#allocation4], 1
    %s1148 = scalar_lea.sflag [#allocation4], 1
    %1149 = vsyncpa %s1148, 1

</llo_original>
